<compile_context>
chip_gen: v7x
topology: tpu7x:2x2x1
jax: 0.10.0
libtpu: 0.0.40
codegen_flags: <defaults>
</compile_context>

<pallas_src>
import jax
import jax.numpy as jnp
from jax.experimental import pallas as pl
from jax.experimental.pallas import tpu as pltpu


# ---------------------------------------------------------------------------
# Kernel
# ---------------------------------------------------------------------------
def mlp_kernel(x_ref, w1_ref, b1_ref, w2_ref, b2_ref, w3_ref, b3_ref, o_ref):
    # Layer 1: Linear + ReLU (dot accumulates in f32; epilogue in f32).
    x = x_ref[...].astype(w1_ref.dtype)
    h = jnp.dot(x, w1_ref[...], preferred_element_type=jnp.float32)
    h = jnp.maximum(h + b1_ref[...].astype(jnp.float32), 0.0)

    # Layer 2: Linear + ReLU.
    h = jnp.dot(h.astype(w2_ref.dtype), w2_ref[...],
                preferred_element_type=jnp.float32)
    h = jnp.maximum(h + b2_ref[...].astype(jnp.float32), 0.0)

    # Final layer: Linear, no activation (matches PyTorch forward). Narrow-N output:
    # store is a masked vst but saves ~32x output HBM bytes vs lane-padding to 128.
    out = jnp.dot(h.astype(w3_ref.dtype), w3_ref[...],
                  preferred_element_type=jnp.float32)
    out = out + b3_ref[...].astype(jnp.float32)
    o_ref[...] = out.astype(o_ref.dtype)


# ---------------------------------------------------------------------------
# Wrapper
# ---------------------------------------------------------------------------
def _round_up(n, m):
    return ((n + m - 1) // m) * m


def pad_params(params, *, lane=128, weights_dtype=jnp.bfloat16):
    """Zero-pad hidden width to 128 lanes; output width kept at action_space_size.

    Weights optionally stored in bf16 (MXU-native on v5e/v6e/v7x); biases stay f32.
    Padding is mathematically exact (zero rows/cols contribute zero through the ReLUs).
    """
    w1, b1, w2, b2, w3, b3 = params
    S, H = w1.shape
    A = w3.shape[1]
    Hp = _round_up(H, lane)
    w1p = jnp.pad(w1, ((0, 0), (0, Hp - H))).astype(weights_dtype)
    b1p = jnp.pad(b1, ((0, 0), (0, Hp - H)))
    w2p = jnp.pad(w2, ((0, Hp - H), (0, Hp - H))).astype(weights_dtype)
    b2p = jnp.pad(b2, ((0, 0), (0, Hp - H)))
    w3p = jnp.pad(w3, ((0, Hp - H), (0, 0))).astype(weights_dtype)  # pad K only, N = A
    b3p = b3
    return (w1p, b1p, w2p, b2p, w3p, b3p), A


def _choose_batch_tiling(B, block_b):
    """Pick (TB, B_pad, n_tiles). Ensures >=2 grid steps when B>8 (v7x megacore),
    TB a multiple of 8, and minimal batch-padding overshoot."""
    B8 = _round_up(B, 8)
    TB = min(_round_up(block_b, 8), B8)
    n = pl.cdiv(B8, TB)
    if B8 > 8:
        n = max(n, 2)  # v7x: give both TensorCores work
    TB = _round_up(pl.cdiv(B8, n), 8)
    B_pad = TB * n
    return TB, B_pad, n


def mlp_forward(x, padded_params, *, block_b=2048):
    """x: [B, S] float32. padded_params: output of pad_params. Returns [B, A] float32."""
    w1, b1, w2, b2, w3, b3 = padded_params
    B, S = x.shape
    H = w1.shape[1]
    A = w3.shape[1]

    TB, B_pad, n_tiles = _choose_batch_tiling(B, block_b)
    if B_pad != B:
        x = jnp.pad(x, ((0, B_pad - B), (0, 0)))
    grid = (n_tiles,)

    flops = 2 * B_pad * (S * H + H * H + H * A)
    bytes_accessed = (
        x.dtype.itemsize * B_pad * S
        + 4 * B_pad * A
        + sum(int(p.size) * p.dtype.itemsize for p in padded_params)
    )

    out = pl.pallas_call(
        mlp_kernel,
        out_shape=jax.ShapeDtypeStruct((B_pad, A), jnp.float32),
        grid=grid,
        in_specs=[
            pl.BlockSpec((TB, S), lambda i: (i, 0)),      # x: tiled over batch
            pl.BlockSpec(w1.shape, lambda i: (0, 0)),     # weights/biases resident in VMEM
            pl.BlockSpec(b1.shape, lambda i: (0, 0)),
            pl.BlockSpec(w2.shape, lambda i: (0, 0)),
            pl.BlockSpec(b2.shape, lambda i: (0, 0)),
            pl.BlockSpec(w3.shape, lambda i: (0, 0)),
            pl.BlockSpec(b3.shape, lambda i: (0, 0)),
        ],
        out_specs=pl.BlockSpec((TB, A), lambda i: (i, 0)),  # narrow output: no col slice
        compiler_params=pltpu.CompilerParams(
            dimension_semantics=("parallel",)),              # shard batch over TCs (v7x)
        cost_estimate=pl.CostEstimate(
            flops=flops, transcendentals=0, bytes_accessed=bytes_accessed),
    )(x, w1, b1, w2, b2, w3, b3)

    return out if B_pad == B else out[:B]


# ---------------------------------------------------------------------------
# Init (matches PyTorch: xavier_uniform_ weights, zero biases) + references
# ---------------------------------------------------------------------------
def xavier_uniform(key, fan_in, fan_out):
    limit = jnp.sqrt(6.0 / (fan_in + fan_out))
    return jax.random.uniform(key, (fan_in, fan_out), jnp.float32, -limit, limit)


def init_params(key, state_space_size, action_space_size, num_neurons=64, num_layers=2):
    layers = [state_space_size] + [num_neurons] * num_layers
    keys = jax.random.split(key, num_layers + 1)
    params = []
    for i in range(num_layers):
        w = xavier_uniform(keys[i], layers[i], layers[i + 1])
        b = jnp.zeros((1, layers[i + 1]), jnp.float32)
        params.extend([w, b])
    wf = xavier_uniform(keys[-1], num_neurons, action_space_size)
    bf = jnp.zeros((1, action_space_size), jnp.float32)
    params.extend([wf, bf])
    return tuple(params)


def reference_forward(x, params):
    """Exact f32 reference (matches the PyTorch module)."""
    w1, b1, w2, b2, w3, b3 = params
    h = jnp.maximum(x @ w1 + b1, 0.0)
    h = jnp.maximum(h @ w2 + b2, 0.0)
    return h @ w3 + b3


def reference_forward_cast(x, params, weights_dtype):
    """Reference that mimics the kernel's weight-dtype cast (for bf16-weight checks)."""
    w1, b1, w2, b2, w3, b3 = params

    def lin(a, w, b):
        return jnp.dot(a.astype(weights_dtype), w.astype(weights_dtype),
                       preferred_element_type=jnp.float32) + b

    h = jnp.maximum(lin(x, w1, b1), 0.0)
    h = jnp.maximum(lin(h, w2, b2), 0.0)
    return lin(h, w3, b3)


# ---------------------------------------------------------------------------
# Main
# ---------------------------------------------------------------------------
if __name__ == "__main__":
    key = jax.random.PRNGKey(0)
    k_x, k_x2, k_p = jax.random.split(key, 3)

    state_space_size = 16
    action_space_size = 4
    num_neurons = 64
    num_layers = 2

    params = init_params(k_p, state_space_size, action_space_size,
                         num_neurons=num_neurons, num_layers=num_layers)

    # --- Test 1: exact f32 path, small batch (DQN action selection; grid=1, no pad/slice).
    padded_f32, A = pad_params(params, weights_dtype=jnp.float32)
    batch = 8
    x = jax.random.normal(k_x, (batch, state_space_size), jnp.float32)
    out = jax.block_until_ready(mlp_forward(x, padded_f32))
    ref = reference_forward(x, params)
    assert out.shape == (batch, action_space_size)
    assert jnp.allclose(out, ref, atol=1e-5, rtol=1e-5), "mismatch vs reference (f32 path)"

    # --- Test 2: bf16-weight path, large non-multiple batch (exercises 2-step grid,
    #             remainder padding + row-slice, tightened B_pad overshoot).
    padded_bf16, _ = pad_params(params, weights_dtype=jnp.bfloat16)
    batch2 = 1000
    x2 = jax.random.normal(k_x2, (batch2, state_space_size), jnp.float32)
    out2 = jax.block_until_ready(mlp_forward(x2, padded_bf16, block_b=2048))
    ref2_cast = reference_forward_cast(x2, params, jnp.bfloat16)
    ref2_f32 = reference_forward(x2, params)
    assert out2.shape == (batch2, action_space_size)
    assert jnp.allclose(out2, ref2_cast, atol=1e-3, rtol=1e-3), \
        "mismatch vs bf16-cast reference (bf16 path)"
    assert jnp.allclose(out2, ref2_f32, atol=5e-2, rtol=5e-2), \
        "mismatch vs f32 reference (bf16 path, loose tol)"

    print("KERNEL_OK")
</pallas_src>

<mosaic_0001>
module attributes {stable_mosaic.version = 11 : i64} {
  func.func @mlp_kernel(%arg0: i32, %arg1: memref<8x16xf32, #tpu.memory_space<vmem>>, %arg2: memref<16x128xf32, #tpu.memory_space<vmem>>, %arg3: memref<1x128xf32, #tpu.memory_space<vmem>>, %arg4: memref<128x128xf32, #tpu.memory_space<vmem>>, %arg5: memref<1x128xf32, #tpu.memory_space<vmem>>, %arg6: memref<128x4xf32, #tpu.memory_space<vmem>>, %arg7: memref<1x4xf32, #tpu.memory_space<vmem>>, %arg8: memref<8x4xf32, #tpu.memory_space<vmem>>) attributes {dimension_semantics = [#tpu.dimension_semantics<parallel>], iteration_bounds = array<i64: 1>, scalar_prefetch = 0 : i64, scratch_operands = 0 : i64, tpu.core_type = #tpu.core_type<tc>, window_params = [{transform_indices = @transform_0, window_bounds = array<i64: 8, 16>}, {pipeline_mode = #tpu.pipeline_mode<synchronous>, transform_indices = @transform_1, window_bounds = array<i64: 16, 128>}, {pipeline_mode = #tpu.pipeline_mode<synchronous>, transform_indices = @transform_2, window_bounds = array<i64: 1, 128>}, {pipeline_mode = #tpu.pipeline_mode<synchronous>, transform_indices = @transform_3, window_bounds = array<i64: 128, 128>}, {pipeline_mode = #tpu.pipeline_mode<synchronous>, transform_indices = @transform_4, window_bounds = array<i64: 1, 128>}, {pipeline_mode = #tpu.pipeline_mode<synchronous>, transform_indices = @transform_5, window_bounds = array<i64: 128, 4>}, {pipeline_mode = #tpu.pipeline_mode<synchronous>, transform_indices = @transform_6, window_bounds = array<i64: 1, 4>}, {transform_indices = @transform_7, window_bounds = array<i64: 8, 4>}]} {
    %c0 = arith.constant 0 : index
    %c0_0 = arith.constant 0 : index
    %0 = vector.load %arg1[%c0, %c0_0] : memref<8x16xf32, #tpu.memory_space<vmem>>, vector<8x16xf32>
    %c0_1 = arith.constant 0 : index
    %c0_2 = arith.constant 0 : index
    %1 = vector.load %arg2[%c0_1, %c0_2] : memref<16x128xf32, #tpu.memory_space<vmem>>, vector<16x128xf32>
    %cst = arith.constant dense<0.000000e+00> : vector<8x128xf32>
    %2 = tpu.matmul %0, %1, %cst {dimension_numbers = #tpu.dot_dimension_numbers<[1], [0], [0], [1], [0, 0, 1, 1], [], []>} : vector<8x16xf32>, vector<16x128xf32>, vector<8x128xf32> -> vector<8x128xf32>
    %c0_3 = arith.constant 0 : index
    %c0_4 = arith.constant 0 : index
    %3 = vector.load %arg3[%c0_3, %c0_4] : memref<1x128xf32, #tpu.memory_space<vmem>>, vector<1x128xf32>
    %4 = vector.broadcast %3 : vector<1x128xf32> to vector<8x128xf32>
    %5 = arith.addf %2, %4 : vector<8x128xf32>
    %cst_5 = arith.constant 0.000000e+00 : f32
    %6 = vector.broadcast %cst_5 : f32 to vector<8x128xf32>
    %7 = arith.maximumf %5, %6 : vector<8x128xf32>
    %c0_6 = arith.constant 0 : index
    %c0_7 = arith.constant 0 : index
    %8 = vector.load %arg4[%c0_6, %c0_7] : memref<128x128xf32, #tpu.memory_space<vmem>>, vector<128x128xf32>
    %cst_8 = arith.constant dense<0.000000e+00> : vector<8x128xf32>
    %9 = tpu.matmul %7, %8, %cst_8 {dimension_numbers = #tpu.dot_dimension_numbers<[1], [0], [0], [1], [0, 0, 1, 1], [], []>} : vector<8x128xf32>, vector<128x128xf32>, vector<8x128xf32> -> vector<8x128xf32>
    %c0_9 = arith.constant 0 : index
    %c0_10 = arith.constant 0 : index
    %10 = vector.load %arg5[%c0_9, %c0_10] : memref<1x128xf32, #tpu.memory_space<vmem>>, vector<1x128xf32>
    %11 = vector.broadcast %10 : vector<1x128xf32> to vector<8x128xf32>
    %12 = arith.addf %9, %11 : vector<8x128xf32>
    %cst_11 = arith.constant 0.000000e+00 : f32
    %13 = vector.broadcast %cst_11 : f32 to vector<8x128xf32>
    %14 = arith.maximumf %12, %13 : vector<8x128xf32>
    %c0_12 = arith.constant 0 : index
    %c0_13 = arith.constant 0 : index
    %15 = vector.load %arg6[%c0_12, %c0_13] : memref<128x4xf32, #tpu.memory_space<vmem>>, vector<128x4xf32>
    %cst_14 = arith.constant dense<0.000000e+00> : vector<8x4xf32>
    %16 = tpu.matmul %14, %15, %cst_14 {dimension_numbers = #tpu.dot_dimension_numbers<[1], [0], [0], [1], [0, 0, 1, 1], [], []>} : vector<8x128xf32>, vector<128x4xf32>, vector<8x4xf32> -> vector<8x4xf32>
    %c0_15 = arith.constant 0 : index
    %c0_16 = arith.constant 0 : index
    %17 = vector.load %arg7[%c0_15, %c0_16] : memref<1x4xf32, #tpu.memory_space<vmem>>, vector<1x4xf32>
    %18 = vector.broadcast %17 : vector<1x4xf32> to vector<8x4xf32>
    %19 = arith.addf %16, %18 : vector<8x4xf32>
    %c0_17 = arith.constant 0 : index
    %c0_18 = arith.constant 0 : index
    %20 = vector.load %arg8[%c0_17, %c0_18] : memref<8x4xf32, #tpu.memory_space<vmem>>, vector<8x4xf32>
    tpu.vector_store %arg8[%c0_17, %c0_18], %19 {strides = array<i32>} : memref<8x4xf32, #tpu.memory_space<vmem>>, vector<8x4xf32>,
    return
  }
  func.func @transform_0(%arg0: i32) -> (i32, i32) {
    %c0_i32 = arith.constant 0 : i32
    %c0_i32_0 = arith.constant 0 : i32
    return %arg0, %c0_i32 : i32, i32
  }
  func.func @transform_1(%arg0: i32) -> (i32, i32) {
    %c0_i32 = arith.constant 0 : i32
    %c0_i32_0 = arith.constant 0 : i32
    %c0_i32_1 = arith.constant 0 : i32
    return %c0_i32, %c0_i32_0 : i32, i32
  }
  func.func @transform_2(%arg0: i32) -> (i32, i32) {
    %c0_i32 = arith.constant 0 : i32
    %c0_i32_0 = arith.constant 0 : i32
    %c0_i32_1 = arith.constant 0 : i32
    return %c0_i32, %c0_i32_0 : i32, i32
  }
  func.func @transform_3(%arg0: i32) -> (i32, i32) {
    %c0_i32 = arith.constant 0 : i32
    %c0_i32_0 = arith.constant 0 : i32
    %c0_i32_1 = arith.constant 0 : i32
    return %c0_i32, %c0_i32_0 : i32, i32
  }
  func.func @transform_4(%arg0: i32) -> (i32, i32) {
    %c0_i32 = arith.constant 0 : i32
    %c0_i32_0 = arith.constant 0 : i32
    %c0_i32_1 = arith.constant 0 : i32
    return %c0_i32, %c0_i32_0 : i32, i32
  }
  func.func @transform_5(%arg0: i32) -> (i32, i32) {
    %c0_i32 = arith.constant 0 : i32
    %c0_i32_0 = arith.constant 0 : i32
    %c0_i32_1 = arith.constant 0 : i32
    return %c0_i32, %c0_i32_0 : i32, i32
  }
  func.func @transform_6(%arg0: i32) -> (i32, i32) {
    %c0_i32 = arith.constant 0 : i32
    %c0_i32_0 = arith.constant 0 : i32
    %c0_i32_1 = arith.constant 0 : i32
    return %c0_i32, %c0_i32_0 : i32, i32
  }
  func.func @transform_7(%arg0: i32) -> (i32, i32) {
    %c0_i32 = arith.constant 0 : i32
    %c0_i32_0 = arith.constant 0 : i32
    return %arg0, %c0_i32 : i32, i32
  }
}

</mosaic_0001>

<llo_original>
// kernel: tpu_custom_call.1
$region0: #{tpu_custom_call.1}
  #allocation0 [shape = 'u32[]', space=smem, size = 0x4, offset = 0x4, fixed_abs, tag = 'smem constant byte address 0x4 - core index']
  #allocation1 [shape = 'u32[144,128]{1,0:T(1,128)}', space=vmem, size = 0x12000, scoped, tag = 'internal scratch']
  %s0 = inlined_call_operand.vmem [shape: f32[8,16], index: 0, kind: input, shape index: {}]
  %s1 = inlined_call_operand.hbm [shape: f32[16,128], index: 1, kind: input, shape index: {}]
  %s2 = inlined_call_operand.vmem [shape: f32[1,128], index: 2, kind: input, shape index: {}]
  %s3 = inlined_call_operand.vmem [shape: f32[128,128], index: 3, kind: input, shape index: {}]
  %s4 = inlined_call_operand.vmem [shape: f32[1,128], index: 4, kind: input, shape index: {}]
  %s5 = inlined_call_operand.vmem [shape: f32[128,4], index: 5, kind: input, shape index: {}]
  %s6 = inlined_call_operand.vmem [shape: f32[1,4], index: 6, kind: input, shape index: {}]
  %s7 = inlined_call_operand.vmem [shape: f32[8,4], index: 7, kind: output, shape index: {}]
  %s8 = sld [smem:[#allocation0]]
  $region42: #{tpu_custom_call.1} parent=0
    _
  %s10 = ssub.s32 1, %s8
  %s11 = scalar_select 0, %s10, %s8
  $region1: #{tpu_custom_call.1} parent=0
    #allocation2 [shape = 'u8[8192]{0}', space=vmem, size = 0x2000, scoped, tag = 'input window, operand 1, single buffered']
    #allocation3 [shape = 's32[1]{0}', space=sflag, size = 0x4, scoped, tag = 'scoped memory for tpu_custom_call.1']
    %12 = vsyncpa [#allocation3], 0
    // Predicated region
    $region2: #{tpu_custom_call.1} parent=1 // pred_check
      _
    $region3: #{tpu_custom_call.1} parent=1 // pred_check_branch
      %14 = sbr.rel (0) target = $region5
    $region4: #{tpu_custom_call.1} parent=1 // pred_region
      _
    $region5: #{tpu_custom_call.1} parent=1 // pred_fallthru
      _
    // Predicated region
    $region6: #{tpu_custom_call.1} parent=1 // pred_check
      _
    $region7: #{tpu_custom_call.1} parent=1 // pred_check_branch
      %16 = sbr.rel (0) target = $region9
    $region8: #{tpu_custom_call.1} parent=1 // pred_region
      %s18 = ssub.s32 256, 256
      %19 = vsyncadd [#allocation3], %s18
      %s20 = sshll.u32 [#allocation2], 4
      %s21 = int_to_ptr.vmem [resolvable:$true] %s20
      %26 = dma.hbm_to_vmem [thread:$0]  %s1, 256, %s21, [#allocation3], 128, 128, 8
    $region9: #{tpu_custom_call.1} parent=1 // pred_fallthru
      _
    // Predicated region
    $region10: #{tpu_custom_call.1} parent=1 // pred_check
      _
    $region11: #{tpu_custom_call.1} parent=1 // pred_check_branch
      %28 = sbr.rel (0) target = $region13
    $region12: #{tpu_custom_call.1} parent=1 // pred_region
      _
    $region13: #{tpu_custom_call.1} parent=1 // pred_fallthru
      _
    // Predicated region
    $region14: #{tpu_custom_call.1} parent=1 // pred_check
      _
    $region15: #{tpu_custom_call.1} parent=1 // pred_check_branch
      %30 = sbr.rel (0) target = $region17
    $region16: #{tpu_custom_call.1} parent=1 // pred_region
      _
    $region17: #{tpu_custom_call.1} parent=1 // pred_fallthru
      _
    // Predicated region
    $region18: #{tpu_custom_call.1} parent=1 // pred_check
      _
    $region19: #{tpu_custom_call.1} parent=1 // pred_check_branch
      %32 = sbr.rel (0) target = $region21
    $region20: #{tpu_custom_call.1} parent=1 // pred_region
      _
    $region21: #{tpu_custom_call.1} parent=1 // pred_fallthru
      _
    // Predicated region
    $region22: #{tpu_custom_call.1} parent=1 // pred_check
      _
    $region23: #{tpu_custom_call.1} parent=1 // pred_check_branch
      %34 = sbr.rel (0) target = $region25
    $region24: #{tpu_custom_call.1} parent=1 // pred_region
      _
    $region25: #{tpu_custom_call.1} parent=1 // pred_fallthru
      _
    // Predicated region
    $region26: #{tpu_custom_call.1} parent=1 // pred_check
      _
    $region27: #{tpu_custom_call.1} parent=1 // pred_check_branch
      %36 = sbr.rel (0) target = $region29
    $region28: #{tpu_custom_call.1} parent=1 // pred_region
      _
    $region29: #{tpu_custom_call.1} parent=1 // pred_fallthru
      _
    // Predicated region
    $region30: #{tpu_custom_call.1} parent=1 // pred_check
      _
    $region31: #{tpu_custom_call.1} parent=1 // pred_check_branch
      %38 = sbr.rel (0) target = $region33
    $region32: #{tpu_custom_call.1} parent=1 // pred_region
      %39 = dma.done [#allocation3], 256
    $region33: #{tpu_custom_call.1} parent=1 // pred_fallthru
      _
    %v40 = vld [vmem:[%s0] sm:$0xff]
    %v41 = vld [vmem:[#allocation2] sm:$0xff]
    %v42 = vld [vmem:[#allocation2 + $0x8] sm:$0xff]
    %v43 = vld [vmem:[%s2] sm:$0x1]
    %v45 = vlaneseq
    %v46 = vshrl.u32 %v45, 7
    %v47 = vsub.s32 0, %v46
    %v48 = vrot.slane %v43, %v47
    %vm50 = vcmask 130048
    %v52 = vsel %vm50, %v40, 0
    %54 = vmatprep.subr.mxu0 0.0
    %55 = vmatpush1.msra.mxu0 %v41
    %56 = vmatprep.subr.mxu0 0.0
    %57 = vmatpush1.msra.mxu0 %v42
    %58 = vmatprep.subr.mxu0 0.0
    %59 = vmatpush1.msra.mxu0 0.0
    %60 = vmatprep.subr.mxu0 0.0
    %61 = vmatpush1.msra.mxu0 0.0
    %62 = vmatprep.subr.mxu0 0.0
    %63 = vmatpush1.msra.mxu0 0.0
    %64 = vmatprep.subr.mxu0 0.0
    %65 = vmatpush1.msra.mxu0 0.0
    %66 = vmatprep.subr.mxu0 0.0
    %67 = vmatpush1.msra.mxu0 0.0
    %68 = vmatprep.subr.mxu0 0.0
    %69 = vmatpush1.msra.mxu0 0.0
    %70 = vmatprep.subr.mxu0 0.0
    %71 = vmatpush1.msra.mxu0 0.0
    %72 = vmatprep.subr.mxu0 0.0
    %73 = vmatpush1.msra.mxu0 0.0
    %74 = vmatprep.subr.mxu0 0.0
    %75 = vmatpush1.msra.mxu0 0.0
    %76 = vmatprep.subr.mxu0 0.0
    %77 = vmatpush1.msra.mxu0 0.0
    %78 = vmatprep.subr.mxu0 0.0
    %79 = vmatpush1.msra.mxu0 0.0
    %80 = vmatprep.subr.mxu0 0.0
    %81 = vmatpush1.msra.mxu0 0.0
    %82 = vmatprep.subr.mxu0 0.0
    %83 = vmatpush1.msra.mxu0 0.0
    %84 = vmatprep.subr.mxu0 0.0
    %85 = vmatpush1.msra.mxu0 0.0
    %86 = vmatprep.subr.mxu0 0.0
    %87 = vmatpush1.msra.mxu0 0.0
    %88 = vmatprep.subr.mxu0 0.0
    %89 = vmatpush1.msra.mxu0 0.0
    %90 = vmatprep.subr.mxu0 0.0
    %91 = vmatpush1.msra.mxu0 0.0
    %92 = vmatprep.subr.mxu0 0.0
    %93 = vmatpush1.msra.mxu0 0.0
    %94 = vmatprep.subr.mxu0 0.0
    %95 = vmatpush1.msra.mxu0 0.0
    %96 = vmatprep.subr.mxu0 0.0
    %97 = vmatpush1.msra.mxu0 0.0
    %98 = vmatprep.subr.mxu0 0.0
    %99 = vmatpush1.msra.mxu0 0.0
    %100 = vmatprep.subr.mxu0 0.0
    %101 = vmatpush1.msra.mxu0 0.0
    %102 = vmatprep.subr.mxu0 0.0
    %103 = vmatpush1.msra.mxu0 0.0
    %104 = vmatprep.subr.mxu0 0.0
    %105 = vmatpush1.msra.mxu0 0.0
    %106 = vmatprep.subr.mxu0 0.0
    %107 = vmatpush1.msra.mxu0 0.0
    %108 = vmatprep.subr.mxu0 0.0
    %109 = vmatpush1.msra.mxu0 0.0
    %110 = vmatprep.subr.mxu0 0.0
    %111 = vmatpush1.msra.mxu0 0.0
    %112 = vmatprep.subr.mxu0 0.0
    %113 = vmatpush1.msra.mxu0 0.0
    %114 = vmatprep.subr.mxu0 0.0
    %115 = vmatpush1.msra.mxu0 0.0
    %116 = vmatprep.subr.mxu0 0.0
    %117 = vmatpush1.msra.mxu0 0.0
    %118 = vmatprep.mubr.f32.mxu0 0.0
    %119 = vmatmul.mubr.f32.gmra.mrb[0].mxu0 %v52
    %v120 = vpop.f32.mrb[0].mxu0
    %v121 = vadd.f32 %v48, %v120
    %v122 = vpop.f32.mrb[0].mxu0
    %123 = vdwg.mxu0
    %v124 = vmax.f32 %v121, 0.0
    %v125 = vld [vmem:[%s3] sm:$0xff]
    %v126 = vld [vmem:[%s3 + $0x8] sm:$0xff]
    %v127 = vld [vmem:[%s3 + $0x10] sm:$0xff]
    %v128 = vld [vmem:[%s3 + $0x18] sm:$0xff]
    %v129 = vld [vmem:[%s3 + $0x20] sm:$0xff]
    %v130 = vld [vmem:[%s3 + $0x28] sm:$0xff]
    %v131 = vld [vmem:[%s3 + $0x30] sm:$0xff]
    %v132 = vld [vmem:[%s3 + $0x38] sm:$0xff]
    %v133 = vld [vmem:[%s3 + $0x40] sm:$0xff]
    %v134 = vld [vmem:[%s3 + $0x48] sm:$0xff]
    %v135 = vld [vmem:[%s3 + $0x50] sm:$0xff]
    %v136 = vld [vmem:[%s3 + $0x58] sm:$0xff]
    %v137 = vld [vmem:[%s3 + $0x60] sm:$0xff]
    %v138 = vld [vmem:[%s3 + $0x68] sm:$0xff]
    %v139 = vld [vmem:[%s3 + $0x70] sm:$0xff]
    %v140 = vld [vmem:[%s3 + $0x78] sm:$0xff]
    %v141 = vld [vmem:[%s4] sm:$0x1]
    %v143 = vlaneseq
    %v144 = vshrl.u32 %v143, 7
    %v145 = vsub.s32 0, %v144
    %v146 = vrot.slane %v141, %v145
    %148 = vmatprep.subr.mxu0 0.0
    %149 = vmatpush1.msra.mxu0 %v125
    %150 = vmatprep.subr.mxu0 0.0
    %151 = vmatpush1.msra.mxu0 %v126
    %152 = vmatprep.subr.mxu0 0.0
    %153 = vmatpush1.msra.mxu0 %v127
    %154 = vmatprep.subr.mxu0 0.0
    %155 = vmatpush1.msra.mxu0 %v128
    %156 = vmatprep.subr.mxu0 0.0
    %157 = vmatpush1.msra.mxu0 %v129
    %158 = vmatprep.subr.mxu0 0.0
    %159 = vmatpush1.msra.mxu0 %v130
    %160 = vmatprep.subr.mxu0 0.0
    %161 = vmatpush1.msra.mxu0 %v131
    %162 = vmatprep.subr.mxu0 0.0
    %163 = vmatpush1.msra.mxu0 %v132
    %164 = vmatprep.subr.mxu0 0.0
    %165 = vmatpush1.msra.mxu0 %v133
    %166 = vmatprep.subr.mxu0 0.0
    %167 = vmatpush1.msra.mxu0 %v134
    %168 = vmatprep.subr.mxu0 0.0
    %169 = vmatpush1.msra.mxu0 %v135
    %170 = vmatprep.subr.mxu0 0.0
    %171 = vmatpush1.msra.mxu0 %v136
    %172 = vmatprep.subr.mxu0 0.0
    %173 = vmatpush1.msra.mxu0 %v137
    %174 = vmatprep.subr.mxu0 0.0
    %175 = vmatpush1.msra.mxu0 %v138
    %176 = vmatprep.subr.mxu0 0.0
    %177 = vmatpush1.msra.mxu0 %v139
    %178 = vmatprep.subr.mxu0 0.0
    %179 = vmatpush1.msra.mxu0 %v140
    %180 = vmatprep.subr.mxu0 0.0
    %181 = vmatpush1.msra.mxu0 0.0
    %182 = vmatprep.subr.mxu0 0.0
    %183 = vmatpush1.msra.mxu0 0.0
    %184 = vmatprep.subr.mxu0 0.0
    %185 = vmatpush1.msra.mxu0 0.0
    %186 = vmatprep.subr.mxu0 0.0
    %187 = vmatpush1.msra.mxu0 0.0
    %188 = vmatprep.subr.mxu0 0.0
    %189 = vmatpush1.msra.mxu0 0.0
    %190 = vmatprep.subr.mxu0 0.0
    %191 = vmatpush1.msra.mxu0 0.0
    %192 = vmatprep.subr.mxu0 0.0
    %193 = vmatpush1.msra.mxu0 0.0
    %194 = vmatprep.subr.mxu0 0.0
    %195 = vmatpush1.msra.mxu0 0.0
    %196 = vmatprep.subr.mxu0 0.0
    %197 = vmatpush1.msra.mxu0 0.0
    %198 = vmatprep.subr.mxu0 0.0
    %199 = vmatpush1.msra.mxu0 0.0
    %200 = vmatprep.subr.mxu0 0.0
    %201 = vmatpush1.msra.mxu0 0.0
    %202 = vmatprep.subr.mxu0 0.0
    %203 = vmatpush1.msra.mxu0 0.0
    %204 = vmatprep.subr.mxu0 0.0
    %205 = vmatpush1.msra.mxu0 0.0
    %206 = vmatprep.subr.mxu0 0.0
    %207 = vmatpush1.msra.mxu0 0.0
    %208 = vmatprep.subr.mxu0 0.0
    %209 = vmatpush1.msra.mxu0 0.0
    %210 = vmatprep.subr.mxu0 0.0
    %211 = vmatpush1.msra.mxu0 0.0
    %212 = vmatprep.mubr.f32.mxu0 0.0
    %213 = vmatmul.mubr.f32.gmra.mrb[0].mxu0 %v124
    %v214 = vpop.f32.mrb[0].mxu0
    %v215 = vadd.f32 %v146, %v214
    %v216 = vpop.f32.mrb[0].mxu0
    %217 = vdwg.mxu0
    %v218 = vmax.f32 %v215, 0.0
    %v219 = vld [vmem:[%s5] sm:$0xff]
    %v220 = vld [vmem:[%s5 + $0x8] sm:$0xff]
    %v221 = vld [vmem:[%s5 + $0x10] sm:$0xff]
    %v222 = vld [vmem:[%s5 + $0x18] sm:$0xff]
    %v223 = vld [vmem:[%s5 + $0x20] sm:$0xff]
    %v224 = vld [vmem:[%s5 + $0x28] sm:$0xff]
    %v225 = vld [vmem:[%s5 + $0x30] sm:$0xff]
    %v226 = vld [vmem:[%s5 + $0x38] sm:$0xff]
    %v227 = vld [vmem:[%s5 + $0x40] sm:$0xff]
    %v228 = vld [vmem:[%s5 + $0x48] sm:$0xff]
    %v229 = vld [vmem:[%s5 + $0x50] sm:$0xff]
    %v230 = vld [vmem:[%s5 + $0x58] sm:$0xff]
    %v231 = vld [vmem:[%s5 + $0x60] sm:$0xff]
    %v232 = vld [vmem:[%s5 + $0x68] sm:$0xff]
    %v233 = vld [vmem:[%s5 + $0x70] sm:$0xff]
    %v234 = vld [vmem:[%s5 + $0x78] sm:$0xff]
    %v235 = vld [vmem:[%s6] sm:$0x1]
    %v237 = vlaneseq
    %v238 = vshrl.u32 %v237, 7
    %v239 = vsub.s32 0, %v238
    %v240 = vrot.slane %v235, %v239
    %242 = vmatprep.subr.mxu0 0.0
    %243 = vmatpush1.msra.mxu0 %v219
    %244 = vmatprep.subr.mxu0 0.0
    %245 = vmatpush1.msra.mxu0 %v220
    %246 = vmatprep.subr.mxu0 0.0
    %247 = vmatpush1.msra.mxu0 %v221
    %248 = vmatprep.subr.mxu0 0.0
    %249 = vmatpush1.msra.mxu0 %v222
    %250 = vmatprep.subr.mxu0 0.0
    %251 = vmatpush1.msra.mxu0 %v223
    %252 = vmatprep.subr.mxu0 0.0
    %253 = vmatpush1.msra.mxu0 %v224
    %254 = vmatprep.subr.mxu0 0.0
    %255 = vmatpush1.msra.mxu0 %v225
    %256 = vmatprep.subr.mxu0 0.0
    %257 = vmatpush1.msra.mxu0 %v226
    %258 = vmatprep.subr.mxu0 0.0
    %259 = vmatpush1.msra.mxu0 %v227
    %260 = vmatprep.subr.mxu0 0.0
    %261 = vmatpush1.msra.mxu0 %v228
    %262 = vmatprep.subr.mxu0 0.0
    %263 = vmatpush1.msra.mxu0 %v229
    %264 = vmatprep.subr.mxu0 0.0
    %265 = vmatpush1.msra.mxu0 %v230
    %266 = vmatprep.subr.mxu0 0.0
    %267 = vmatpush1.msra.mxu0 %v231
    %268 = vmatprep.subr.mxu0 0.0
    %269 = vmatpush1.msra.mxu0 %v232
    %270 = vmatprep.subr.mxu0 0.0
    %271 = vmatpush1.msra.mxu0 %v233
    %272 = vmatprep.subr.mxu0 0.0
    %273 = vmatpush1.msra.mxu0 %v234
    %274 = vmatprep.subr.mxu0 0.0
    %275 = vmatpush1.msra.mxu0 0.0
    %276 = vmatprep.subr.mxu0 0.0
    %277 = vmatpush1.msra.mxu0 0.0
    %278 = vmatprep.subr.mxu0 0.0
    %279 = vmatpush1.msra.mxu0 0.0
    %280 = vmatprep.subr.mxu0 0.0
    %281 = vmatpush1.msra.mxu0 0.0
    %282 = vmatprep.subr.mxu0 0.0
    %283 = vmatpush1.msra.mxu0 0.0
    %284 = vmatprep.subr.mxu0 0.0
    %285 = vmatpush1.msra.mxu0 0.0
    %286 = vmatprep.subr.mxu0 0.0
    %287 = vmatpush1.msra.mxu0 0.0
    %288 = vmatprep.subr.mxu0 0.0
    %289 = vmatpush1.msra.mxu0 0.0
    %290 = vmatprep.subr.mxu0 0.0
    %291 = vmatpush1.msra.mxu0 0.0
    %292 = vmatprep.subr.mxu0 0.0
    %293 = vmatpush1.msra.mxu0 0.0
    %294 = vmatprep.subr.mxu0 0.0
    %295 = vmatpush1.msra.mxu0 0.0
    %296 = vmatprep.subr.mxu0 0.0
    %297 = vmatpush1.msra.mxu0 0.0
    %298 = vmatprep.subr.mxu0 0.0
    %299 = vmatpush1.msra.mxu0 0.0
    %300 = vmatprep.subr.mxu0 0.0
    %301 = vmatpush1.msra.mxu0 0.0
    %302 = vmatprep.subr.mxu0 0.0
    %303 = vmatpush1.msra.mxu0 0.0
    %304 = vmatprep.subr.mxu0 0.0
    %305 = vmatpush1.msra.mxu0 0.0
    %306 = vmatprep.mubr.f32.mxu0 0.0
    %307 = vmatmul.mubr.f32.gmra.mrb[0].mxu0 %v218
    %v308 = vpop.f32.mrb[0].mxu0
    %v309 = vadd.f32 %v240, %v308
    %v310 = vpop.f32.mrb[0].mxu0
    %311 = vdwg.mxu0
    %vm312 = vcmask 31744
    %313 = vst.msk [vmem:[%s7] sm:$0xff] %vm312, %v309
    // Predicated region
    $region34: #{tpu_custom_call.1} parent=1 // pred_check
      _
    $region35: #{tpu_custom_call.1} parent=1 // pred_check_branch
      %315 = sbr.rel (0) target = $region37
    $region36: #{tpu_custom_call.1} parent=1 // pred_region
      _
    $region37: #{tpu_custom_call.1} parent=1 // pred_fallthru
      _
    // Predicated region
    $region38: #{tpu_custom_call.1} parent=1 // pred_check
      _
    $region39: #{tpu_custom_call.1} parent=1 // pred_check_branch
      %317 = sbr.rel (0) target = $region41
    $region40: #{tpu_custom_call.1} parent=1 // pred_region
      _
    $region41: #{tpu_custom_call.1} parent=1 // pred_fallthru
      _
    %318 = vsyncpa [#allocation3], 1

</llo_original>
